<compile_context>
chip_gen: v5e
topology: v5e:2x2
jax: 0.10.0
libtpu: 0.0.40
codegen_flags: <defaults>
</compile_context>

<pallas_src>
import functools

import jax
import jax.numpy as jnp
from jax.experimental import pallas as pl
from jax.experimental.pallas import tpu as pltpu  # noqa: F401  (TPU backend)


def _sum_all(x):
    """Sum a (R, C) f32 array down to a (1, 1) tile (lane then sublane)."""
    s = jnp.sum(x, axis=-1, keepdims=True)    # lane reduce    -> (R, 1)
    return jnp.sum(s, axis=0, keepdims=True)  # sublane reduce -> (1, 1)


def _motloss_kernel(slab_ref, out_ref, *, distill, smooth, N, K):
    B = slab_ref.shape[0]
    NK = N * K
    slab = slab_ref[...]                      # single (B, SLAB_W) f32 load

    plan = slab[:, 0:NK]                      # (B, N*K)
    cast = slab[:, NK:2 * NK]                 # (B, N*K)
    locs_t = slab[:, 2 * NK:3 * NK]           # locs tiled N times, (B, N*K)
    pcmd = slab[:, 3 * NK:3 * NK + N]         # (B, N)
    cmds_i = slab[:, 3 * NK + N:3 * NK + N + 1].astype(jnp.int32)   # (B, 1)

    # gather(x, 1, cmds): lane mask selecting the chosen K-wide block per row.
    lane = jax.lax.broadcasted_iota(jnp.int32, (B, NK), 1)
    lo = cmds_i * K
    sel = jnp.logical_and(lane >= lo, lane < lo + K).astype(jnp.float32)

    inv_bk = 1.0 / float(B * K)
    plan_loss = _sum_all(jnp.abs(plan - locs_t) * sel) * inv_bk     # (1, 1)

    # nn.BCELoss semantics: log terms clamped at -100, mean reduction.
    logp = jnp.maximum(jnp.log(pcmd), -100.0)
    log1mp = jnp.maximum(jnp.log(1.0 - pcmd), -100.0)

    if distill:
        elocs = slab[:, 3 * NK + N + 1:4 * NK + N + 1]              # (B, N*K)
        ecmds = slab[:, 4 * NK + N + 1:4 * NK + 2 * N + 1]          # (B, N)
        cast_loss = _sum_all(jnp.abs(cast - elocs)) * (1.0 / float(B * NK))
        label = ecmds
    else:
        cast_loss = _sum_all(jnp.abs(cast - locs_t) * sel) * inv_bk
        onehot = (jax.lax.broadcasted_iota(jnp.int32, (B, N), 1)
                  == cmds_i).astype(jnp.float32)                    # (B, N)
        label = (1.0 - smooth) * onehot + smooth / float(N)

    bce = -(label * logp + (1.0 - label) * log1mp)                  # (B, N)
    cmd_loss = _sum_all(bce) * (1.0 / float(B * N))                 # (1, 1)

    out_ref[...] = jnp.concatenate(
        [(plan_loss + cast_loss) * 0.5, cmd_loss], axis=-1)         # (1, 2)


def make_motloss(distill, smooth, B, N, T):
    K = 2 * T
    NK = N * K
    raw_w = (4 * NK + 2 * N + 1) if distill else (3 * NK + N + 1)
    slab_w = ((raw_w + 127) // 128) * 128     # lane-dense, unmasked loads

    kernel = functools.partial(_motloss_kernel, distill=distill,
                               smooth=smooth, N=N, K=K)

    call = pl.pallas_call(
        kernel,
        grid=(1,),
        in_specs=[pl.BlockSpec((B, slab_w), lambda i: (0, 0))],
        out_specs=pl.BlockSpec((1, 2), lambda i: (0, 0)),
        out_shape=jax.ShapeDtypeStruct((1, 2), jnp.float32),
        compiler_params=pltpu.CompilerParams(
            dimension_semantics=("arbitrary",)),
    )

    def forward(plan_locs, cast_locs, locs, pred_cmds,
                expert_locs, expert_cmds, cmds):
        pieces = [
            plan_locs.reshape(B, NK).astype(jnp.float32),
            cast_locs.reshape(B, NK).astype(jnp.float32),
            jnp.tile(locs.reshape(B, K), (1, N)).astype(jnp.float32),
            pred_cmds.reshape(B, N).astype(jnp.float32),
            cmds.reshape(B, 1).astype(jnp.float32),
        ]
        if distill:
            pieces.append(expert_locs.reshape(B, NK).astype(jnp.float32))
            pieces.append(expert_cmds.reshape(B, N).astype(jnp.float32))
        slab = jnp.concatenate(pieces, axis=-1)
        pad = slab_w - slab.shape[-1]
        if pad:
            slab = jnp.pad(slab, ((0, 0), (0, pad)))
        out = call(slab)
        return out[0, 0], out[0, 1]

    return jax.jit(forward)


def motloss_ref(distill, smooth, plan_locs, cast_locs, locs, pred_cmds,
                expert_locs, expert_cmds, cmds):
    """Pure-JAX reference reproducing the PyTorch forward."""
    B, N, T, _ = plan_locs.shape

    def sel(x):
        idx = cmds.astype(jnp.int32)[:, None, None, None]
        return jnp.take_along_axis(x, jnp.broadcast_to(idx, (B, 1, T, 2)),
                                   axis=1)[:, 0]

    def bce(p, y):
        logp = jnp.maximum(jnp.log(p), -100.0)
        log1mp = jnp.maximum(jnp.log(1.0 - p), -100.0)
        return jnp.mean(-(y * logp + (1.0 - y) * log1mp))

    plan_sel = sel(plan_locs)
    plan_losses = jnp.mean(jnp.abs(plan_sel - locs), axis=(1, 2))
    if distill:
        cast_loss = jnp.mean(jnp.abs(cast_locs - expert_locs))
        cmd_loss = bce(pred_cmds, expert_cmds)
    else:
        cast_sel = sel(cast_locs)
        cast_loss = jnp.mean(jnp.abs(cast_sel - locs))
        label = (1.0 - smooth) * jax.nn.one_hot(cmds, N) + smooth / N
        cmd_loss = bce(pred_cmds, label)
    plan_loss = jnp.mean(plan_losses)  # idxs is None
    return (plan_loss + cast_loss) / 2.0, cmd_loss


if __name__ == "__main__":
    B, N, T = 8, 4, 8
    smooth = 0.1

    key = jax.random.PRNGKey(0)
    k1, k2, k3, k4, k5, k6, k7 = jax.random.split(key, 7)
    plan_locs = jax.random.normal(k1, (B, N, T, 2), jnp.float32)
    cast_locs = jax.random.normal(k2, (B, N, T, 2), jnp.float32)
    locs = jax.random.normal(k3, (B, T, 2), jnp.float32)
    pred_cmds = jax.nn.softmax(jax.random.normal(k4, (B, N), jnp.float32), -1)
    expert_locs = jax.random.normal(k5, (B, N, T, 2), jnp.float32)
    expert_cmds = jax.nn.softmax(jax.random.normal(k6, (B, N), jnp.float32), -1)
    cmds = jax.random.randint(k7, (B,), 0, N)

    for distill in (False, True):
        fwd = make_motloss(distill, smooth, B, N, T)
        main_l, cmd_l = fwd(plan_locs, cast_locs, locs, pred_cmds,
                            expert_locs, expert_cmds, cmds)
        jax.block_until_ready((main_l, cmd_l))
        ref_main, ref_cmd = motloss_ref(distill, smooth, plan_locs, cast_locs,
                                        locs, pred_cmds, expert_locs,
                                        expert_cmds, cmds)
        assert jnp.allclose(main_l, ref_main, atol=1e-5, rtol=1e-5), (
            distill, main_l, ref_main)
        assert jnp.allclose(cmd_l, ref_cmd, atol=1e-5, rtol=1e-5), (
            distill, cmd_l, ref_cmd)

    print("KERNEL_OK")
</pallas_src>

<mosaic_0001>
module attributes {stable_mosaic.version = 11 : i64} {
  func.func @_motloss_kernel(%arg0: i32, %arg1: memref<8x256xf32, #tpu.memory_space<vmem>>, %arg2: memref<1x2xf32, #tpu.memory_space<vmem>>) attributes {dimension_semantics = [#tpu.dimension_semantics<arbitrary>], iteration_bounds = array<i64: 1>, scalar_prefetch = 0 : i64, scratch_operands = 0 : i64, tpu.core_type = #tpu.core_type<tc>, window_params = [{pipeline_mode = #tpu.pipeline_mode<synchronous>, transform_indices = @transform_0, window_bounds = array<i64: 8, 256>}, {pipeline_mode = #tpu.pipeline_mode<synchronous>, transform_indices = @transform_1, window_bounds = array<i64: 1, 2>}]} {
    %c0 = arith.constant 0 : index
    %c0_0 = arith.constant 0 : index
    %0 = vector.load %arg1[%c0, %c0_0] : memref<8x256xf32, #tpu.memory_space<vmem>>, vector<8x256xf32>
    %1 = vector.extract_strided_slice %0 {offsets = [0, 0], sizes = [8, 64], strides = [1, 1]} : vector<8x256xf32> to vector<8x64xf32>
    %2 = vector.extract_strided_slice %0 {offsets = [0, 64], sizes = [8, 64], strides = [1, 1]} : vector<8x256xf32> to vector<8x64xf32>
    %3 = vector.extract_strided_slice %0 {offsets = [0, 128], sizes = [8, 64], strides = [1, 1]} : vector<8x256xf32> to vector<8x64xf32>
    %4 = vector.extract_strided_slice %0 {offsets = [0, 192], sizes = [8, 4], strides = [1, 1]} : vector<8x256xf32> to vector<8x4xf32>
    %5 = vector.extract_strided_slice %0 {offsets = [0, 196], sizes = [8, 1], strides = [1, 1]} : vector<8x256xf32> to vector<8x1xf32>
    %6 = arith.fptosi %5 : vector<8x1xf32> to vector<8x1xi32>
    %7 = tpu.iota {dimensions = array<i32: 1>} : vector<8x64xi32>
    %c16_i32 = arith.constant 16 : i32
    %8 = vector.broadcast %c16_i32 : i32 to vector<8x1xi32>
    %9 = arith.muli %6, %8 : vector<8x1xi32>
    %10 = vector.broadcast %9 : vector<8x1xi32> to vector<8x64xi32>
    %11 = arith.cmpi sge, %7, %10 : vector<8x64xi32>
    %c16_i32_1 = arith.constant 16 : i32
    %12 = vector.broadcast %c16_i32_1 : i32 to vector<8x1xi32>
    %13 = arith.addi %9, %12 : vector<8x1xi32>
    %14 = vector.broadcast %13 : vector<8x1xi32> to vector<8x64xi32>
    %15 = arith.cmpi slt, %7, %14 : vector<8x64xi32>
    %16 = arith.andi %11, %15 : vector<8x64xi1>
    %17 = arith.extui %16 : vector<8x64xi1> to vector<8x64xi32>
    %18 = arith.sitofp %17 : vector<8x64xi32> to vector<8x64xf32>
    %19 = arith.subf %1, %3 : vector<8x64xf32>
    %20 = math.absf %19 : vector<8x64xf32>
    %21 = arith.mulf %20, %18 : vector<8x64xf32>
    %cst = arith.constant dense<0.000000e+00> : vector<8xf32>
    %22 = vector.multi_reduction <add>, %21, %cst [1] : vector<8x64xf32> to vector<8xf32>
    %23 = vector.shape_cast %22 : vector<8xf32> to vector<8x1xf32>
    %cst_2 = arith.constant dense<0.000000e+00> : vector<1xf32>
    %24 = vector.multi_reduction <add>, %23, %cst_2 [0] : vector<8x1xf32> to vector<1xf32>
    %25 = vector.shape_cast %24 : vector<1xf32> to vector<1x1xf32>
    %cst_3 = arith.constant 7.812500e-03 : f32
    %26 = vector.broadcast %cst_3 : f32 to vector<1x1xf32>
    %27 = arith.mulf %25, %26 : vector<1x1xf32>
    %28 = math.log %4 : vector<8x4xf32>
    %cst_4 = arith.constant -1.000000e+02 : f32
    %29 = vector.broadcast %cst_4 : f32 to vector<8x4xf32>
    %30 = arith.maximumf %28, %29 : vector<8x4xf32>
    %cst_5 = arith.constant 1.000000e+00 : f32
    %31 = vector.broadcast %cst_5 : f32 to vector<8x4xf32>
    %32 = arith.subf %31, %4 : vector<8x4xf32>
    %33 = math.log %32 : vector<8x4xf32>
    %cst_6 = arith.constant -1.000000e+02 : f32
    %34 = vector.broadcast %cst_6 : f32 to vector<8x4xf32>
    %35 = arith.maximumf %33, %34 : vector<8x4xf32>
    %36 = arith.subf %2, %3 : vector<8x64xf32>
    %37 = math.absf %36 : vector<8x64xf32>
    %38 = arith.mulf %37, %18 : vector<8x64xf32>
    %cst_7 = arith.constant dense<0.000000e+00> : vector<8xf32>
    %39 = vector.multi_reduction <add>, %38, %cst_7 [1] : vector<8x64xf32> to vector<8xf32>
    %40 = vector.shape_cast %39 : vector<8xf32> to vector<8x1xf32>
    %cst_8 = arith.constant dense<0.000000e+00> : vector<1xf32>
    %41 = vector.multi_reduction <add>, %40, %cst_8 [0] : vector<8x1xf32> to vector<1xf32>
    %42 = vector.shape_cast %41 : vector<1xf32> to vector<1x1xf32>
    %cst_9 = arith.constant 7.812500e-03 : f32
    %43 = vector.broadcast %cst_9 : f32 to vector<1x1xf32>
    %44 = arith.mulf %42, %43 : vector<1x1xf32>
    %45 = tpu.iota {dimensions = array<i32: 1>} : vector<8x4xi32>
    %46 = vector.broadcast %6 : vector<8x1xi32> to vector<8x4xi32>
    %47 = arith.cmpi eq, %45, %46 : vector<8x4xi32>
    %48 = arith.extui %47 : vector<8x4xi1> to vector<8x4xi32>
    %49 = arith.sitofp %48 : vector<8x4xi32> to vector<8x4xf32>
    %cst_10 = arith.constant 0.899999976 : f32
    %50 = vector.broadcast %cst_10 : f32 to vector<8x4xf32>
    %51 = arith.mulf %50, %49 : vector<8x4xf32>
    %cst_11 = arith.constant 2.500000e-02 : f32
    %52 = vector.broadcast %cst_11 : f32 to vector<8x4xf32>
    %53 = arith.addf %51, %52 : vector<8x4xf32>
    %54 = arith.mulf %53, %30 : vector<8x4xf32>
    %cst_12 = arith.constant 1.000000e+00 : f32
    %55 = vector.broadcast %cst_12 : f32 to vector<8x4xf32>
    %56 = arith.subf %55, %53 : vector<8x4xf32>
    %57 = arith.mulf %56, %35 : vector<8x4xf32>
    %58 = arith.addf %54, %57 : vector<8x4xf32>
    %cst_13 = arith.constant 0.000000e+00 : f32
    %59 = vector.broadcast %cst_13 : f32 to vector<8x4xf32>
    %60 = arith.subf %59, %58 : vector<8x4xf32>
    %cst_14 = arith.constant dense<0.000000e+00> : vector<8xf32>
    %61 = vector.multi_reduction <add>, %60, %cst_14 [1] : vector<8x4xf32> to vector<8xf32>
    %62 = vector.shape_cast %61 : vector<8xf32> to vector<8x1xf32>
    %cst_15 = arith.constant dense<0.000000e+00> : vector<1xf32>
    %63 = vector.multi_reduction <add>, %62, %cst_15 [0] : vector<8x1xf32> to vector<1xf32>
    %64 = vector.shape_cast %63 : vector<1xf32> to vector<1x1xf32>
    %cst_16 = arith.constant 3.125000e-02 : f32
    %65 = vector.broadcast %cst_16 : f32 to vector<1x1xf32>
    %66 = arith.mulf %64, %65 : vector<1x1xf32>
    %67 = arith.addf %27, %44 : vector<1x1xf32>
    %cst_17 = arith.constant 5.000000e-01 : f32
    %68 = vector.broadcast %cst_17 : f32 to vector<1x1xf32>
    %69 = arith.mulf %67, %68 : vector<1x1xf32>
    %70 = tpu.concatenate %69, %66 in 1 : vector<1x1xf32>, vector<1x1xf32> -> vector<1x2xf32>
    %c0_18 = arith.constant 0 : index
    %c0_19 = arith.constant 0 : index
    %71 = vector.load %arg2[%c0_18, %c0_19] : memref<1x2xf32, #tpu.memory_space<vmem>>, vector<1x2xf32>
    tpu.vector_store %arg2[%c0_18, %c0_19], %70 {strides = array<i32>} : memref<1x2xf32, #tpu.memory_space<vmem>>, vector<1x2xf32>,
    return
  }
  func.func @transform_0(%arg0: i32) -> (i32, i32) {
    %c0_i32 = arith.constant 0 : i32
    %c0_i32_0 = arith.constant 0 : i32
    %c0_i32_1 = arith.constant 0 : i32
    return %c0_i32, %c0_i32_0 : i32, i32
  }
  func.func @transform_1(%arg0: i32) -> (i32, i32) {
    %c0_i32 = arith.constant 0 : i32
    %c0_i32_0 = arith.constant 0 : i32
    %c0_i32_1 = arith.constant 0 : i32
    return %c0_i32, %c0_i32_0 : i32, i32
  }
}

</mosaic_0001>

<llo_original>
// kernel: tile.7
$region0: #{tile.7}
  %s0 = inlined_call_operand.vmem [shape: f32[8,4,16], index: 0, kind: input, shape index: {}]
  %s1 = inlined_call_operand.vmem [shape: f32[8,64], index: 1, kind: output, shape index: {}]
  $region1: #{tile.7} parent=0
    #allocation0 [shape = 'u8[32768]{0}', space=vmem, size = 0x8000, scoped, tag = 'scoped mem for input reshape']
    %s3 = ssub.s32 16, 1
    %s4 = scalar_lea.vmem %s0, 28
    %v5 = vld [vmem:[%s4] sm:%s3]
    %s6 = scalar_lea.vmem [#allocation0], 56
    %7 = vst [vmem:[%s6] sm:%s3] %v5
    %s8 = scalar_lea.vmem %s0, 24
    %v9 = vld [vmem:[%s8] sm:%s3]
    %s10 = scalar_lea.vmem [#allocation0], 48
    %11 = vst [vmem:[%s10] sm:%s3] %v9
    %s12 = scalar_lea.vmem %s0, 20
    %v13 = vld [vmem:[%s12] sm:%s3]
    %s14 = scalar_lea.vmem [#allocation0], 40
    %15 = vst [vmem:[%s14] sm:%s3] %v13
    %s16 = scalar_lea.vmem %s0, 16
    %v17 = vld [vmem:[%s16] sm:%s3]
    %s18 = scalar_lea.vmem [#allocation0], 32
    %19 = vst [vmem:[%s18] sm:%s3] %v17
    %s20 = scalar_lea.vmem %s0, 12
    %v21 = vld [vmem:[%s20] sm:%s3]
    %s22 = scalar_lea.vmem [#allocation0], 24
    %23 = vst [vmem:[%s22] sm:%s3] %v21
    %s24 = scalar_lea.vmem %s0, 8
    %v25 = vld [vmem:[%s24] sm:%s3]
    %s26 = scalar_lea.vmem [#allocation0], 16
    %27 = vst [vmem:[%s26] sm:%s3] %v25
    %s28 = scalar_lea.vmem %s0, 4
    %v29 = vld [vmem:[%s28] sm:%s3]
    %s30 = scalar_lea.vmem [#allocation0], 8
    %31 = vst [vmem:[%s30] sm:%s3] %v29
    %v32 = vld [vmem:[%s0] sm:%s3]
    %33 = vst [vmem:[#allocation0] sm:%s3] %v32
    %v34 = vld [vmem:[#allocation0] ss:$8 sm:$0xf]
    %v35 = vld [vmem:[#allocation0] ss:$8 sm:$0xf0]
    %vm36 = vcmask 1047556
    %v37 = vsel %vm36, %v35, %v34
    %vm38 = vcmask 130048
    %39 = vst.msk [vmem:[%s1] sm:$0xff] %vm38, %v37
    %s40 = scalar_lea.vmem [#allocation0], 3
    %v41 = vld [vmem:[%s40] ss:$8 sm:$0xf]
    %s42 = scalar_lea.vmem [#allocation0], 3
    %v43 = vld [vmem:[%s42] ss:$8 sm:$0xf0]
    %vm44 = vcmask 1047556
    %v45 = vsel %vm44, %v43, %v41
    %46 = vrot.lane.b32.xlu0 %v45, 48
    %v47 = vpop.permute.xlu0 %46
    %vm48 = vcmask 523648
    %49 = vst.msk [vmem:[%s1] sm:$0xff] %vm48, %v47
    %s50 = scalar_lea.vmem [#allocation0], 2
    %v51 = vld [vmem:[%s50] ss:$8 sm:$0xf]
    %s52 = scalar_lea.vmem [#allocation0], 2
    %v53 = vld [vmem:[%s52] ss:$8 sm:$0xf0]
    %vm54 = vcmask 1047556
    %v55 = vsel %vm54, %v53, %v51
    %56 = vrot.lane.b32.xlu0 %v55, 32
    %v57 = vpop.permute.xlu0 %56
    %vm58 = vcmask 392448
    %59 = vst.msk [vmem:[%s1] sm:$0xff] %vm58, %v57
    %s60 = scalar_lea.vmem [#allocation0], 1
    %v61 = vld [vmem:[%s60] ss:$8 sm:$0xf]
    %s62 = scalar_lea.vmem [#allocation0], 1
    %v63 = vld [vmem:[%s62] ss:$8 sm:$0xf0]
    %vm64 = vcmask 1047556
    %v65 = vsel %vm64, %v63, %v61
    %66 = vrot.lane.b32.xlu0 %v65, 16
    %v67 = vpop.permute.xlu0 %66
    %vm68 = vcmask 261248
    %69 = vst.msk [vmem:[%s1] sm:$0xff] %vm68, %v67

// kernel: forward.1
$region0: #{forward.1}
  #allocation0 [shape = 'u32[]', space=smem, size = 0x4, offset = 0x4, fixed_abs, tag = 'smem constant byte address 0x4 - core index']
  #allocation1 [shape = 'u32[72,128]{1,0:T(1,128)}', space=vmem, size = 0x9000, scoped, tag = 'internal scratch']
  %s0 = inlined_call_operand.vmem [shape: f32[8,256], index: 0, kind: input, shape index: {}]
  %s1 = inlined_call_operand.vmem [shape: f32[1,2], index: 1, kind: output, shape index: {}]
  %s2 = sld [smem:[#allocation0]]
  $region14: #{forward.1} parent=0
    _
  %s4 = ssub.s32 1, %s2
  %s5 = scalar_select 0, %s4, %s2
  // Predicated region
  $region2: #{forward.1} parent=0 // pred_check
    _
  $region3: #{forward.1} parent=0 // pred_check_branch
    %7 = sbr.rel (0) target = $region5
  $region4: #{forward.1} parent=0 // pred_region
    _
  $region5: #{forward.1} parent=0 // pred_fallthru
    _
  %v8 = vld [vmem:[%s0] sm:$0xff]
  %v9 = vld [vmem:[%s0 + $0x8] sm:$0xff]
  %v10 = vcvt.f32.s32.to.zero.pseudo %v9
  %v11 = vlaneseq
  %v12 = vand.u32 %v11, 127
  %v13 = vmul.u32 %v10, 16
  %14 = vset.pattern.permute.xlu0 68
  %15 = vperm.xlu0 %14, %v13
  %v16 = vpop.permute.xlu0 %15
  %vm17 = vcmp.ge.s32.totalorder %v12, %v16
  %v18 = vadd.s32 %v13, 16
  %19 = vset.pattern.permute.xlu0 68
  %20 = vperm.xlu0 %19, %v18
  %v21 = vpop.permute.xlu0 %20
  %vm22 = vcmp.lt.s32.totalorder %v12, %v21
  %vm23 = vmand %vm17, %vm22
  %v24 = vsel %vm23, 1, 0
  %v25 = vcvt.s32.f32 %v24
  %v26 = vsub.f32 %v8, %v9
  %v27 = vand.u32 2147483647, %v26
  %v28 = vmul.f32 %v27, %v25
  %vm29 = vcmask 523264
  %v30 = vsel %vm29, %v28, 0.0
  %31 = vadd.xlane.f32.xlu0 %v30
  %v32 = vpop.xlane.xlu0 %31
  %v33 = vrot.slane %v32, 4
  %v34 = vadd.f32 %v32, %v33
  %v35 = vrot.slane %v34, 2
  %v36 = vadd.f32 %v34, %v35
  %v37 = vrot.slane %v36, 1
  %v38 = vadd.f32 %v36, %v37
  %v39 = vmul.f32 %v38, 0.0078125
  %v40 = vlog2.pop %v9
  %v41 = vmul.f32 %v40, 0.6931472
  %v42 = vmax.f32 %v41, -100.0
  %v43 = vsub.f32 1.0, %v9
  %v44 = vlog2.pop %v43
  %v45 = vmul.f32 %v44, 0.6931472
  %v46 = vmax.f32 %v45, -100.0
  %48 = vrot.lane.b32.xlu0 %v9, 64
  %v49 = vpop.permute.xlu0 %48
  %v51 = vsub.f32 %v8, %v49
  %v52 = vand.u32 2147483647, %v51
  %54 = vrot.lane.b32.xlu0 %v25, 64
  %v55 = vpop.permute.xlu0 %54
  %v57 = vmul.f32 %v52, %v55
  %59 = vrot.lane.b32.xlu0 %v57, 64
  %v60 = vpop.permute.xlu0 %59
  %v62 = vsel %vm29, %v60, 0.0
  %63 = vadd.xlane.f32.xlu0 %v62
  %v64 = vpop.xlane.xlu0 %63
  %v65 = vrot.slane %v64, 4
  %v66 = vadd.f32 %v64, %v65
  %v67 = vrot.slane %v66, 2
  %v68 = vadd.f32 %v66, %v67
  %v69 = vrot.slane %v68, 1
  %v70 = vadd.f32 %v68, %v69
  %v71 = vmul.f32 %v70, 0.0078125
  %72 = vset.pattern.permute.xlu0 68
  %73 = vperm.xlu0 %72, %v10
  %v74 = vpop.permute.xlu0 %73
  %vm75 = vcmp.eq.s32.totalorder %v12, %v74
  %v76 = vsel %vm75, 1, 0
  %v77 = vcvt.s32.f32 %v76
  %v78 = vmul.f32 %v77, 0.9
  %v79 = vadd.f32 %v78, 0.025
  %81 = vrot.lane.b32.xlu0 %v42, 64
  %v82 = vpop.permute.xlu0 %81
  %v84 = vmul.f32 %v79, %v82
  %v85 = vsub.f32 1.0, %v79
  %87 = vrot.lane.b32.xlu0 %v46, 64
  %v88 = vpop.permute.xlu0 %87
  %v90 = vmul.f32 %v85, %v88
  %v91 = vadd.f32 %v84, %v90
  %v92 = vsub.f32 0.0, %v91
  %vm93 = vcmask 31744
  %v94 = vsel %vm93, %v92, 0.0
  %95 = vadd.xlane.f32.xlu0 %v94
  %v96 = vpop.xlane.xlu0 %95
  %v97 = vrot.slane %v96, 4
  %v98 = vadd.f32 %v96, %v97
  %v99 = vrot.slane %v98, 2
  %v100 = vadd.f32 %v98, %v99
  %v101 = vrot.slane %v100, 1
  %v102 = vadd.f32 %v100, %v101
  %v103 = vmul.f32 %v102, 0.03125
  %v104 = vadd.f32 %v39, %v71
  %v105 = vmul.f32 %v104, 0.5
  %vm106 = vcmask 7168
  %v107 = vsel %vm106, %v105, %v103
  %vm108 = vcmask 8192
  %109 = vst.msk [vmem:[%s1] sm:$0x1] %vm108, %v107
  // Predicated region
  $region6: #{forward.1} parent=0 // pred_check
    _
  $region7: #{forward.1} parent=0 // pred_check_branch
    %111 = sbr.rel (0) target = $region9
  $region8: #{forward.1} parent=0 // pred_region
    _
  $region9: #{forward.1} parent=0 // pred_fallthru
    _
  // Predicated region
  $region10: #{forward.1} parent=0 // pred_check
    _
  $region11: #{forward.1} parent=0 // pred_check_branch
    %113 = sbr.rel (0) target = $region13
  $region12: #{forward.1} parent=0 // pred_region
    _
  $region13: #{forward.1} parent=0 // pred_fallthru
    _

</llo_original>
